<compile_context>
chip_gen: v7x
topology: tpu7x:2x2x1
jax: 0.10.0
libtpu: 0.0.40
codegen_flags: <defaults>
</compile_context>

<pallas_src>
import functools

import jax
import jax.numpy as jnp
from jax.experimental import pallas as pl
from jax.experimental.pallas import tpu as pltpu


def _round_up(x, m):
    return (x + m - 1) // m * m


def _cdefunc_kernel(z_ref, w_in_ref, b_in_ref, w_hid_ref, b_hid_ref,
                    w_out_ref, b_out_ref, o_ref, *, num_hidden):
    """Fused MLP on one batch tile: linear_in -> relu -> [linear -> relu]* ->
    linear_out -> tanh.  Matmul operands are bf16 (or whatever dtype the
    wrapper cast them to); accumulation and elementwise math are f32."""
    mm_dtype = w_in_ref.dtype

    # linear_in + ReLU
    h = jnp.dot(z_ref[...], w_in_ref[...], preferred_element_type=jnp.float32)
    h = jnp.maximum(h + b_in_ref[...], 0.0)            # (TB, HHp) + (1, HHp)

    # hidden linears + ReLU (static unroll over stacked weights)
    for i in range(num_hidden):
        h = jnp.dot(h.astype(mm_dtype), w_hid_ref[i],
                    preferred_element_type=jnp.float32)
        h = jnp.maximum(h + b_hid_ref[i], 0.0)          # (TB, HHp) + (1, HHp)

    # linear_out + tanh
    out = jnp.dot(h.astype(mm_dtype), w_out_ref[...],
                  preferred_element_type=jnp.float32)
    out = jnp.tanh(out + b_out_ref[...])                # (TB, OUTp) + (1, OUTp)
    o_ref[...] = out.astype(o_ref.dtype)


def cdefunc_forward(z, params, *, input_channels, hidden_channels,
                    tile_b=512, matmul_dtype=jnp.bfloat16):
    """z: (B, hidden_channels) f32 -> (B, hidden_channels, input_channels)."""
    w_in, b_in, w_hid, b_hid, w_out, b_out = params
    B, H = z.shape
    assert H == hidden_channels
    HH = w_in.shape[1]
    num_hidden = w_hid.shape[0]
    out_dim = input_channels * hidden_channels
    out_dtype = z.dtype

    # ---- lane-density padding of the feature dims (multiples of 128) ----
    HH_p = _round_up(HH, 128)
    OUT_p = _round_up(out_dim, 128)
    nh_eff = max(num_hidden, 1)   # keep a non-empty stack even with 0 hidden linears

    w_in_p = jnp.zeros((H, HH_p), jnp.float32).at[:, :HH].set(w_in)
    b_in_p = jnp.zeros((1, HH_p), jnp.float32).at[0, :HH].set(b_in)
    w_hid_p = jnp.zeros((nh_eff, HH_p, HH_p), jnp.float32)
    b_hid_p = jnp.zeros((nh_eff, 1, HH_p), jnp.float32)
    if num_hidden > 0:
        w_hid_p = w_hid_p.at[:num_hidden, :HH, :HH].set(w_hid)
        b_hid_p = b_hid_p.at[:num_hidden, 0, :HH].set(b_hid)
    w_out_p = jnp.zeros((HH_p, OUT_p), jnp.float32).at[:HH, :out_dim].set(w_out)
    b_out_p = jnp.zeros((1, OUT_p), jnp.float32).at[0, :out_dim].set(b_out)

    # ---- batch tiling (grid over batch; pad B up to a tile multiple) ----
    TILE_B = min(tile_b, _round_up(B, 8))
    B_pad = _round_up(B, TILE_B)
    z_p = z if B_pad == B else jnp.zeros((B_pad, H), z.dtype).at[:B].set(z)

    # bf16 MXU operands (f32 accumulate inside the kernel); biases stay f32.
    z_p = z_p.astype(matmul_dtype)
    w_in_p = w_in_p.astype(matmul_dtype)
    w_hid_p = w_hid_p.astype(matmul_dtype)
    w_out_p = w_out_p.astype(matmul_dtype)

    kernel = functools.partial(_cdefunc_kernel, num_hidden=num_hidden)
    grid = (B_pad // TILE_B,)

    flat = pl.pallas_call(
        kernel,
        out_shape=jax.ShapeDtypeStruct((B_pad, OUT_p), out_dtype),
        grid_spec=pltpu.PrefetchScalarGridSpec(
            num_scalar_prefetch=0,
            grid=grid,
            in_specs=[
                pl.BlockSpec((TILE_B, H), lambda i: (i, 0)),          # z tile
                pl.BlockSpec((H, HH_p), lambda i: (0, 0)),            # w_in  (resident)
                pl.BlockSpec((1, HH_p), lambda i: (0, 0)),            # b_in  (resident)
                pl.BlockSpec((nh_eff, HH_p, HH_p), lambda i: (0, 0, 0)),  # w_hid (resident)
                pl.BlockSpec((nh_eff, 1, HH_p), lambda i: (0, 0, 0)),     # b_hid (resident)
                pl.BlockSpec((HH_p, OUT_p), lambda i: (0, 0)),        # w_out (resident)
                pl.BlockSpec((1, OUT_p), lambda i: (0, 0)),           # b_out (resident)
            ],
            out_specs=pl.BlockSpec((TILE_B, OUT_p), lambda i: (i, 0)),
        ),
        compiler_params=pltpu.CompilerParams(
            dimension_semantics=("parallel",),          # megacore-shard batch on v7x
            vmem_limit_bytes=32 * 1024 * 1024,          # safe on v7x's 64 MiB VMEM
        ),
    )(z_p, w_in_p, b_in_p, w_hid_p, b_hid_p, w_out_p, b_out_p)

    # Slice off batch / lane padding, then same as torch: z.view(B, H, IC).
    # (Valid because w_out's columns are ordered hidden-major / input-minor.)
    out = flat[:B, :out_dim]
    return out.reshape(B, hidden_channels, input_channels)


def init_params(key, input_channels, hidden_channels, hidden_hidden_channels,
                num_hidden_layers):
    """Deterministic synthetic init (torch-style uniform +-1/sqrt(fan_in)).
    w_out columns are laid out hidden-major / input-minor (matches torch view)."""
    HH = hidden_hidden_channels
    out_dim = input_channels * hidden_channels
    num_hidden = num_hidden_layers - 1
    ks = jax.random.split(key, 6)

    def unif(k, shape, fan_in):
        bound = 1.0 / jnp.sqrt(jnp.float32(fan_in))
        return jax.random.uniform(k, shape, jnp.float32, -bound, bound)

    w_in = unif(ks[0], (hidden_channels, HH), hidden_channels)
    b_in = unif(ks[1], (HH,), hidden_channels)
    w_hid = unif(ks[2], (max(num_hidden, 0), HH, HH), HH)
    b_hid = unif(ks[3], (max(num_hidden, 0), HH), HH)
    w_out = unif(ks[4], (HH, out_dim), HH)
    b_out = unif(ks[5], (out_dim,), HH)
    return (w_in, b_in, w_hid, b_hid, w_out, b_out)


def reference_forward(z, params, *, input_channels, hidden_channels,
                      matmul_dtype=jnp.float32):
    """Pure-JAX reference.  matmul_dtype=bfloat16 mirrors the kernel's MXU casts."""
    w_in, b_in, w_hid, b_hid, w_out, b_out = params
    cast = lambda x: x.astype(matmul_dtype)
    h = jnp.dot(cast(z), cast(w_in), preferred_element_type=jnp.float32) + b_in
    h = jnp.maximum(h, 0.0)
    for i in range(w_hid.shape[0]):
        h = jnp.dot(cast(h), cast(w_hid[i]),
                    preferred_element_type=jnp.float32) + b_hid[i]
        h = jnp.maximum(h, 0.0)
    out = jnp.tanh(jnp.dot(cast(h), cast(w_out),
                           preferred_element_type=jnp.float32) + b_out)
    return out.reshape(z.shape[0], hidden_channels, input_channels)


if __name__ == "__main__":
    # Small shapes consistent with the module's forward: z is (batch, hidden).
    batch = 2
    input_channels = 4
    hidden_channels = 32
    hidden_hidden_channels = 32
    num_hidden_layers = 3   # -> 2 extra hidden linears

    key = jax.random.PRNGKey(0)
    k_z, k_p = jax.random.split(key)
    z = jax.random.normal(k_z, (batch, hidden_channels), jnp.float32)
    params = init_params(k_p, input_channels, hidden_channels,
                         hidden_hidden_channels, num_hidden_layers)

    out = cdefunc_forward(z, params,
                          input_channels=input_channels,
                          hidden_channels=hidden_channels)
    out = jax.block_until_ready(out)
    assert out.shape == (batch, hidden_channels, input_channels)

    # Tight check vs a reference that mirrors the kernel's bf16 MXU casts.
    ref_bf16 = reference_forward(z, params,
                                 input_channels=input_channels,
                                 hidden_channels=hidden_channels,
                                 matmul_dtype=jnp.bfloat16)
    assert jnp.allclose(out, ref_bf16, atol=1e-3, rtol=1e-3)

    # Looser sanity check vs the full-f32 module semantics.
    ref_f32 = reference_forward(z, params,
                                input_channels=input_channels,
                                hidden_channels=hidden_channels,
                                matmul_dtype=jnp.float32)
    assert jnp.allclose(out, ref_f32, atol=5e-2, rtol=5e-2)

    print("KERNEL_OK")
</pallas_src>

<mosaic_0001>
module attributes {stable_mosaic.version = 11 : i64} {
  func.func @_cdefunc_kernel(%arg0: i32, %arg1: memref<8x32xbf16, #tpu.memory_space<vmem>>, %arg2: memref<32x128xbf16, #tpu.memory_space<vmem>>, %arg3: memref<1x128xf32, #tpu.memory_space<vmem>>, %arg4: memref<2x128x128xbf16, #tpu.memory_space<vmem>>, %arg5: memref<2x1x128xf32, #tpu.memory_space<vmem>>, %arg6: memref<128x128xbf16, #tpu.memory_space<vmem>>, %arg7: memref<1x128xf32, #tpu.memory_space<vmem>>, %arg8: memref<8x128xf32, #tpu.memory_space<vmem>>) attributes {dimension_semantics = [#tpu.dimension_semantics<parallel>], iteration_bounds = array<i64: 1>, scalar_prefetch = 0 : i64, scratch_operands = 0 : i64, tpu.core_type = #tpu.core_type<tc>, window_params = [{transform_indices = @transform_0, window_bounds = array<i64: 8, 32>}, {pipeline_mode = #tpu.pipeline_mode<synchronous>, transform_indices = @transform_1, window_bounds = array<i64: 32, 128>}, {pipeline_mode = #tpu.pipeline_mode<synchronous>, transform_indices = @transform_2, window_bounds = array<i64: 1, 128>}, {pipeline_mode = #tpu.pipeline_mode<synchronous>, transform_indices = @transform_3, window_bounds = array<i64: 2, 128, 128>}, {pipeline_mode = #tpu.pipeline_mode<synchronous>, transform_indices = @transform_4, window_bounds = array<i64: 2, 1, 128>}, {pipeline_mode = #tpu.pipeline_mode<synchronous>, transform_indices = @transform_5, window_bounds = array<i64: 128, 128>}, {pipeline_mode = #tpu.pipeline_mode<synchronous>, transform_indices = @transform_6, window_bounds = array<i64: 1, 128>}, {transform_indices = @transform_7, window_bounds = array<i64: 8, 128>}]} {
    %c0 = arith.constant 0 : index
    %c0_0 = arith.constant 0 : index
    %0 = vector.load %arg1[%c0, %c0_0] : memref<8x32xbf16, #tpu.memory_space<vmem>>, vector<8x32xbf16>
    %c0_1 = arith.constant 0 : index
    %c0_2 = arith.constant 0 : index
    %1 = vector.load %arg2[%c0_1, %c0_2] : memref<32x128xbf16, #tpu.memory_space<vmem>>, vector<32x128xbf16>
    %cst = arith.constant dense<0.000000e+00> : vector<8x128xf32>
    %2 = tpu.matmul %0, %1, %cst {dimension_numbers = #tpu.dot_dimension_numbers<[1], [0], [0], [1], [0, 0, 1, 1], [], []>} : vector<8x32xbf16>, vector<32x128xbf16>, vector<8x128xf32> -> vector<8x128xf32>
    %c0_3 = arith.constant 0 : index
    %c0_4 = arith.constant 0 : index
    %3 = vector.load %arg3[%c0_3, %c0_4] : memref<1x128xf32, #tpu.memory_space<vmem>>, vector<1x128xf32>
    %4 = vector.broadcast %3 : vector<1x128xf32> to vector<8x128xf32>
    %5 = arith.addf %2, %4 : vector<8x128xf32>
    %cst_5 = arith.constant 0.000000e+00 : f32
    %6 = vector.broadcast %cst_5 : f32 to vector<8x128xf32>
    %7 = arith.maximumf %5, %6 : vector<8x128xf32>
    %8 = arith.truncf %7 : vector<8x128xf32> to vector<8x128xbf16>
    %c0_6 = arith.constant 0 : index
    %c0_7 = arith.constant 0 : index
    %c0_8 = arith.constant 0 : index
    %9 = vector.load %arg4[%c0_6, %c0_7, %c0_8] : memref<2x128x128xbf16, #tpu.memory_space<vmem>>, vector<1x128x128xbf16>
    %10 = vector.shape_cast %9 : vector<1x128x128xbf16> to vector<128x128xbf16>
    %cst_9 = arith.constant dense<0.000000e+00> : vector<8x128xf32>
    %11 = tpu.matmul %8, %10, %cst_9 {dimension_numbers = #tpu.dot_dimension_numbers<[1], [0], [0], [1], [0, 0, 1, 1], [], []>} : vector<8x128xbf16>, vector<128x128xbf16>, vector<8x128xf32> -> vector<8x128xf32>
    %c0_10 = arith.constant 0 : index
    %c0_11 = arith.constant 0 : index
    %c0_12 = arith.constant 0 : index
    %12 = vector.load %arg5[%c0_10, %c0_11, %c0_12] : memref<2x1x128xf32, #tpu.memory_space<vmem>>, vector<1x1x128xf32>
    %13 = vector.shape_cast %12 : vector<1x1x128xf32> to vector<1x128xf32>
    %14 = vector.broadcast %13 : vector<1x128xf32> to vector<8x128xf32>
    %15 = arith.addf %11, %14 : vector<8x128xf32>
    %cst_13 = arith.constant 0.000000e+00 : f32
    %16 = vector.broadcast %cst_13 : f32 to vector<8x128xf32>
    %17 = arith.maximumf %15, %16 : vector<8x128xf32>
    %18 = arith.truncf %17 : vector<8x128xf32> to vector<8x128xbf16>
    %c1 = arith.constant 1 : index
    %c0_14 = arith.constant 0 : index
    %c0_15 = arith.constant 0 : index
    %19 = vector.load %arg4[%c1, %c0_14, %c0_15] : memref<2x128x128xbf16, #tpu.memory_space<vmem>>, vector<1x128x128xbf16>
    %20 = vector.shape_cast %19 : vector<1x128x128xbf16> to vector<128x128xbf16>
    %cst_16 = arith.constant dense<0.000000e+00> : vector<8x128xf32>
    %21 = tpu.matmul %18, %20, %cst_16 {dimension_numbers = #tpu.dot_dimension_numbers<[1], [0], [0], [1], [0, 0, 1, 1], [], []>} : vector<8x128xbf16>, vector<128x128xbf16>, vector<8x128xf32> -> vector<8x128xf32>
    %c1_17 = arith.constant 1 : index
    %c0_18 = arith.constant 0 : index
    %c0_19 = arith.constant 0 : index
    %22 = vector.load %arg5[%c1_17, %c0_18, %c0_19] : memref<2x1x128xf32, #tpu.memory_space<vmem>>, vector<1x1x128xf32>
    %23 = vector.shape_cast %22 : vector<1x1x128xf32> to vector<1x128xf32>
    %24 = vector.broadcast %23 : vector<1x128xf32> to vector<8x128xf32>
    %25 = arith.addf %21, %24 : vector<8x128xf32>
    %cst_20 = arith.constant 0.000000e+00 : f32
    %26 = vector.broadcast %cst_20 : f32 to vector<8x128xf32>
    %27 = arith.maximumf %25, %26 : vector<8x128xf32>
    %28 = arith.truncf %27 : vector<8x128xf32> to vector<8x128xbf16>
    %c0_21 = arith.constant 0 : index
    %c0_22 = arith.constant 0 : index
    %29 = vector.load %arg6[%c0_21, %c0_22] : memref<128x128xbf16, #tpu.memory_space<vmem>>, vector<128x128xbf16>
    %cst_23 = arith.constant dense<0.000000e+00> : vector<8x128xf32>
    %30 = tpu.matmul %28, %29, %cst_23 {dimension_numbers = #tpu.dot_dimension_numbers<[1], [0], [0], [1], [0, 0, 1, 1], [], []>} : vector<8x128xbf16>, vector<128x128xbf16>, vector<8x128xf32> -> vector<8x128xf32>
    %c0_24 = arith.constant 0 : index
    %c0_25 = arith.constant 0 : index
    %31 = vector.load %arg7[%c0_24, %c0_25] : memref<1x128xf32, #tpu.memory_space<vmem>>, vector<1x128xf32>
    %32 = vector.broadcast %31 : vector<1x128xf32> to vector<8x128xf32>
    %33 = arith.addf %30, %32 : vector<8x128xf32>
    %34 = math.tanh %33 : vector<8x128xf32>
    %c0_26 = arith.constant 0 : index
    %c0_27 = arith.constant 0 : index
    %35 = vector.load %arg8[%c0_26, %c0_27] : memref<8x128xf32, #tpu.memory_space<vmem>>, vector<8x128xf32>
    tpu.vector_store %arg8[%c0_26, %c0_27], %34 {strides = array<i32>} : memref<8x128xf32, #tpu.memory_space<vmem>>, vector<8x128xf32>,
    return
  }
  func.func @transform_0(%arg0: i32) -> (i32, i32) {
    %c0_i32 = arith.constant 0 : i32
    %c0_i32_0 = arith.constant 0 : i32
    return %arg0, %c0_i32 : i32, i32
  }
  func.func @transform_1(%arg0: i32) -> (i32, i32) {
    %c0_i32 = arith.constant 0 : i32
    %c0_i32_0 = arith.constant 0 : i32
    %c0_i32_1 = arith.constant 0 : i32
    return %c0_i32, %c0_i32_0 : i32, i32
  }
  func.func @transform_2(%arg0: i32) -> (i32, i32) {
    %c0_i32 = arith.constant 0 : i32
    %c0_i32_0 = arith.constant 0 : i32
    %c0_i32_1 = arith.constant 0 : i32
    return %c0_i32, %c0_i32_0 : i32, i32
  }
  func.func @transform_3(%arg0: i32) -> (i32, i32, i32) {
    %c0_i32 = arith.constant 0 : i32
    %c0_i32_0 = arith.constant 0 : i32
    %c0_i32_1 = arith.constant 0 : i32
    %c0_i32_2 = arith.constant 0 : i32
    return %c0_i32, %c0_i32_0, %c0_i32_1 : i32, i32, i32
  }
  func.func @transform_4(%arg0: i32) -> (i32, i32, i32) {
    %c0_i32 = arith.constant 0 : i32
    %c0_i32_0 = arith.constant 0 : i32
    %c0_i32_1 = arith.constant 0 : i32
    %c0_i32_2 = arith.constant 0 : i32
    return %c0_i32, %c0_i32_0, %c0_i32_1 : i32, i32, i32
  }
  func.func @transform_5(%arg0: i32) -> (i32, i32) {
    %c0_i32 = arith.constant 0 : i32
    %c0_i32_0 = arith.constant 0 : i32
    %c0_i32_1 = arith.constant 0 : i32
    return %c0_i32, %c0_i32_0 : i32, i32
  }
  func.func @transform_6(%arg0: i32) -> (i32, i32) {
    %c0_i32 = arith.constant 0 : i32
    %c0_i32_0 = arith.constant 0 : i32
    %c0_i32_1 = arith.constant 0 : i32
    return %c0_i32, %c0_i32_0 : i32, i32
  }
  func.func @transform_7(%arg0: i32) -> (i32, i32) {
    %c0_i32 = arith.constant 0 : i32
    %c0_i32_0 = arith.constant 0 : i32
    return %arg0, %c0_i32 : i32, i32
  }
}

</mosaic_0001>

<llo_original>
// kernel: tpu_custom_call.1
$region0: #{tpu_custom_call.1}
  #allocation0 [shape = 'u32[]', space=smem, size = 0x4, offset = 0x4, fixed_abs, tag = 'smem constant byte address 0x4 - core index']
  #allocation1 [shape = 'u32[144,128]{1,0:T(1,128)}', space=vmem, size = 0x12000, scoped, tag = 'internal scratch']
  %s0 = inlined_call_operand.hbm [shape: bf16[8,32], index: 0, kind: input, shape index: {}]
  %s1 = inlined_call_operand.hbm [shape: bf16[32,128], index: 1, kind: input, shape index: {}]
  %s2 = inlined_call_operand.vmem [shape: f32[1,128], index: 2, kind: input, shape index: {}]
  %s3 = inlined_call_operand.hbm [shape: bf16[2,128,128], index: 3, kind: input, shape index: {}]
  %s4 = inlined_call_operand.vmem [shape: f32[2,1,128], index: 4, kind: input, shape index: {}]
  %s5 = inlined_call_operand.hbm [shape: bf16[128,128], index: 5, kind: input, shape index: {}]
  %s6 = inlined_call_operand.vmem [shape: f32[1,128], index: 6, kind: input, shape index: {}]
  %s7 = inlined_call_operand.hbm [shape: f32[8,128], index: 7, kind: output, shape index: {}]
  %s8 = sld [smem:[#allocation0]]
  $region54: #{tpu_custom_call.1} parent=0
    _
  %s10 = ssub.s32 1, %s8
  %s11 = scalar_select 0, %s10, %s8
  $region1: #{tpu_custom_call.1} parent=0
    #allocation2 [shape = 'u8[2048]{0}', space=vmem, size = 0x800, scoped, tag = 'input window, operand 0, single buffered']
    #allocation3 [shape = 's32[1]{0}', space=sflag, size = 0x4, scoped, tag = 'scoped memory for tpu_custom_call.1']
    #allocation4 [shape = 's32[1]{0}', space=sflag, size = 0x4, scoped, tag = 'scoped memory for tpu_custom_call.1']
    #allocation5 [shape = 'u8[8192]{0}', space=vmem, size = 0x2000, scoped, tag = 'input window, operand 1, single buffered']
    #allocation6 [shape = 's32[1]{0}', space=sflag, size = 0x4, scoped, tag = 'scoped memory for tpu_custom_call.1']
    #allocation7 [shape = 'u8[65536]{0}', space=vmem, size = 0x10000, scoped, tag = 'input window, operand 3, single buffered']
    #allocation8 [shape = 'u8[32768]{0}', space=vmem, size = 0x8000, scoped, tag = 'input window, operand 5, single buffered']
    #allocation9 [shape = 's32[1]{0}', space=sflag, size = 0x4, scoped, tag = 'scoped memory for tpu_custom_call.1']
    #allocation10 [shape = 'u8[4096]{0}', space=vmem, size = 0x1000, scoped, tag = 'output window, operand 0, single buffered']
    %12 = vsyncpa [#allocation3], 0
    %13 = vsyncpa [#allocation6], 0
    %14 = vsyncpa [#allocation9], 0
    %15 = vsyncpa [#allocation4], 0
    // Predicated region
    $region2: #{tpu_custom_call.1} parent=1 // pred_check
      _
    $region3: #{tpu_custom_call.1} parent=1 // pred_check_branch
      %17 = sbr.rel (0) target = $region5
    $region4: #{tpu_custom_call.1} parent=1 // pred_region
      %s19 = ssub.s32 64, 64
      %20 = vsyncadd [#allocation3], %s19
      %s22 = sshll.u32 [#allocation2], 4
      %s23 = int_to_ptr.vmem [resolvable:$true] %s22
      %25 = dma.hbm_to_vmem [thread:$0]  %s0, 64, %s23, [#allocation3]
    $region5: #{tpu_custom_call.1} parent=1 // pred_fallthru
      _
    // Predicated region
    $region6: #{tpu_custom_call.1} parent=1 // pred_check
      _
    $region7: #{tpu_custom_call.1} parent=1 // pred_check_branch
      %27 = sbr.rel (0) target = $region9
    $region8: #{tpu_custom_call.1} parent=1 // pred_region
      %s29 = ssub.s32 256, 256
      %30 = vsyncadd [#allocation6], %s29
      %s31 = sshll.u32 [#allocation5], 4
      %s32 = int_to_ptr.vmem [resolvable:$true] %s31
      %37 = dma.hbm_to_vmem [thread:$0]  %s1, 256, %s32, [#allocation6], 64, 64, 4
    $region9: #{tpu_custom_call.1} parent=1 // pred_fallthru
      _
    // Predicated region
    $region10: #{tpu_custom_call.1} parent=1 // pred_check
      _
    $region11: #{tpu_custom_call.1} parent=1 // pred_check_branch
      %39 = sbr.rel (0) target = $region13
    $region12: #{tpu_custom_call.1} parent=1 // pred_region
      _
    $region13: #{tpu_custom_call.1} parent=1 // pred_fallthru
      _
    // Predicated region
    $region14: #{tpu_custom_call.1} parent=1 // pred_check
      _
    $region15: #{tpu_custom_call.1} parent=1 // pred_check_branch
      %41 = sbr.rel (0) target = $region17
    $region16: #{tpu_custom_call.1} parent=1 // pred_region
      %s43 = ssub.s32 2048, 2048
      %44 = vsyncadd [#allocation6], %s43
      %s45 = sshll.u32 [#allocation7], 4
      %s46 = int_to_ptr.vmem [resolvable:$true] %s45
      %51 = dma.hbm_to_vmem [thread:$0]  %s3, 2048, %s46, [#allocation6], 64, 64, 4
    $region17: #{tpu_custom_call.1} parent=1 // pred_fallthru
      _
    // Predicated region
    $region18: #{tpu_custom_call.1} parent=1 // pred_check
      _
    $region19: #{tpu_custom_call.1} parent=1 // pred_check_branch
      %53 = sbr.rel (0) target = $region21
    $region20: #{tpu_custom_call.1} parent=1 // pred_region
      _
    $region21: #{tpu_custom_call.1} parent=1 // pred_fallthru
      _
    // Predicated region
    $region22: #{tpu_custom_call.1} parent=1 // pred_check
      _
    $region23: #{tpu_custom_call.1} parent=1 // pred_check_branch
      %55 = sbr.rel (0) target = $region25
    $region24: #{tpu_custom_call.1} parent=1 // pred_region
      %s57 = ssub.s32 1024, 1024
      %58 = vsyncadd [#allocation9], %s57
      %s59 = sshll.u32 [#allocation8], 4
      %s60 = int_to_ptr.vmem [resolvable:$true] %s59
      %65 = dma.hbm_to_vmem [thread:$0]  %s5, 1024, %s60, [#allocation9], 64, 64, 4
    $region25: #{tpu_custom_call.1} parent=1 // pred_fallthru
      _
    // Predicated region
    $region26: #{tpu_custom_call.1} parent=1 // pred_check
      _
    $region27: #{tpu_custom_call.1} parent=1 // pred_check_branch
      %67 = sbr.rel (0) target = $region29
    $region28: #{tpu_custom_call.1} parent=1 // pred_region
      _
    $region29: #{tpu_custom_call.1} parent=1 // pred_fallthru
      _
    // Predicated region
    $region30: #{tpu_custom_call.1} parent=1 // pred_check
      _
    $region31: #{tpu_custom_call.1} parent=1 // pred_check_branch
      %69 = sbr.rel (0) target = $region33
    $region32: #{tpu_custom_call.1} parent=1 // pred_region
      %70 = dma.done [#allocation3], 64
    $region33: #{tpu_custom_call.1} parent=1 // pred_fallthru
      _
    // Predicated region
    $region34: #{tpu_custom_call.1} parent=1 // pred_check
      _
    $region35: #{tpu_custom_call.1} parent=1 // pred_check_branch
      %72 = sbr.rel (0) target = $region37
    $region36: #{tpu_custom_call.1} parent=1 // pred_region
      %73 = dma.done [#allocation6], 256
    $region37: #{tpu_custom_call.1} parent=1 // pred_fallthru
      _
    // Predicated region
    $region38: #{tpu_custom_call.1} parent=1 // pred_check
      _
    $region39: #{tpu_custom_call.1} parent=1 // pred_check_branch
      %75 = sbr.rel (0) target = $region41
    $region40: #{tpu_custom_call.1} parent=1 // pred_region
      %76 = dma.done [#allocation6], 2048
    $region41: #{tpu_custom_call.1} parent=1 // pred_fallthru
      _
    // Predicated region
    $region42: #{tpu_custom_call.1} parent=1 // pred_check
      _
    $region43: #{tpu_custom_call.1} parent=1 // pred_check_branch
      %78 = sbr.rel (0) target = $region45
    $region44: #{tpu_custom_call.1} parent=1 // pred_region
      %79 = dma.done [#allocation9], 1024
    $region45: #{tpu_custom_call.1} parent=1 // pred_fallthru
      _
    %v81 = vld [vmem:[#allocation2] sm:$0xf]
    %v82 = vld [vmem:[#allocation5] sm:$0xf]
    %v83 = vld [vmem:[#allocation5 + $0x4] sm:$0xf]
    %v84 = vld [vmem:[#allocation5 + $0x8] sm:$0xf]
    %v85 = vld [vmem:[#allocation5 + $0xc] sm:$0xf]
    %v86 = vld [vmem:[%s2] sm:$0x1]
    %v88 = vlaneseq
    %v89 = vshrl.u32 %v88, 7
    %v90 = vsub.s32 0, %v89
    %v91 = vrot.slane %v86, %v90
    %v97 = vunpack.c.l.b16 %v82
    %v98 = vunpack.c.l.b16 %v83
    %v99 = vunpack.c.l.b16 %v84
    %v100 = vunpack.c.l.b16 %v85
    %v101 = vpack.c.b16 %v98, %v97
    %v102 = vpack.c.b16 %v100, %v99
    %vm105 = vcmask 261120
    %v107 = vsel %vm105, %v81, 0
    %109 = vmatprep.subr.bf16.mxu0 0
    %110 = vmatpush1.bf16.msra.mxu0 %v101
    %111 = vmatprep.subr.bf16.mxu0 0
    %112 = vmatpush1.bf16.msra.mxu0 %v102
    %113 = vmatprep.subr.bf16.mxu0 0
    %114 = vmatpush1.bf16.msra.mxu0 0
    %115 = vmatprep.subr.bf16.mxu0 0
    %116 = vmatpush1.bf16.msra.mxu0 0
    %117 = vmatprep.subr.bf16.mxu0 0
    %118 = vmatpush1.bf16.msra.mxu0 0
    %119 = vmatprep.subr.bf16.mxu0 0
    %120 = vmatpush1.bf16.msra.mxu0 0
    %121 = vmatprep.subr.bf16.mxu0 0
    %122 = vmatpush1.bf16.msra.mxu0 0
    %123 = vmatprep.subr.bf16.mxu0 0
    %124 = vmatpush1.bf16.msra.mxu0 0
    %125 = vmatprep.subr.bf16.mxu0 0
    %126 = vmatpush1.bf16.msra.mxu0 0
    %127 = vmatprep.subr.bf16.mxu0 0
    %128 = vmatpush1.bf16.msra.mxu0 0
    %129 = vmatprep.subr.bf16.mxu0 0
    %130 = vmatpush1.bf16.msra.mxu0 0
    %131 = vmatprep.subr.bf16.mxu0 0
    %132 = vmatpush1.bf16.msra.mxu0 0
    %133 = vmatprep.subr.bf16.mxu0 0
    %134 = vmatpush1.bf16.msra.mxu0 0
    %135 = vmatprep.subr.bf16.mxu0 0
    %136 = vmatpush1.bf16.msra.mxu0 0
    %137 = vmatprep.subr.bf16.mxu0 0
    %138 = vmatpush1.bf16.msra.mxu0 0
    %139 = vmatprep.subr.bf16.mxu0 0
    %140 = vmatpush1.bf16.msra.mxu0 0
    %141 = vmatprep.mubr.bf16.mxu0 0
    %142 = vmatmul.mubr.bf16.gmra.mrb[0].mxu0 %v107
    %v143 = vpop.f32.mrb[0].mxu0
    %v144 = vadd.f32 %v91, %v143
    %v145 = vpop.f32.mrb[0].mxu0
    %v146 = vpop.f32.mrb[0].mxu0
    %v147 = vpop.f32.mrb[0].mxu0
    %148 = vdwg.mxu0
    %v149 = vmax.f32 %v144, 0.0
    %v150 = vpack.c.bf16 %v149, %v149
    %v151 = vld [vmem:[#allocation7] sm:$0xf]
    %v152 = vld [vmem:[#allocation7 + $0x4] sm:$0xf]
    %v153 = vld [vmem:[#allocation7 + $0x8] sm:$0xf]
    %v154 = vld [vmem:[#allocation7 + $0xc] sm:$0xf]
    %v155 = vld [vmem:[#allocation7 + $0x10] sm:$0xf]
    %v156 = vld [vmem:[#allocation7 + $0x14] sm:$0xf]
    %v157 = vld [vmem:[#allocation7 + $0x18] sm:$0xf]
    %v158 = vld [vmem:[#allocation7 + $0x1c] sm:$0xf]
    %v159 = vld [vmem:[#allocation7 + $0x20] sm:$0xf]
    %v160 = vld [vmem:[#allocation7 + $0x24] sm:$0xf]
    %v161 = vld [vmem:[#allocation7 + $0x28] sm:$0xf]
    %v162 = vld [vmem:[#allocation7 + $0x2c] sm:$0xf]
    %v163 = vld [vmem:[#allocation7 + $0x30] sm:$0xf]
    %v164 = vld [vmem:[#allocation7 + $0x34] sm:$0xf]
    %v165 = vld [vmem:[#allocation7 + $0x38] sm:$0xf]
    %v166 = vld [vmem:[#allocation7 + $0x3c] sm:$0xf]
    %v167 = vld [vmem:[%s4] sm:$0x1]
    %v169 = vlaneseq
    %v170 = vshrl.u32 %v169, 7
    %v171 = vsub.s32 0, %v170
    %v172 = vrot.slane %v167, %v171
    %v190 = vunpack.c.l.b16 %v151
    %v191 = vunpack.c.l.b16 %v152
    %v192 = vunpack.c.l.b16 %v153
    %v193 = vunpack.c.l.b16 %v154
    %v194 = vunpack.c.l.b16 %v155
    %v195 = vunpack.c.l.b16 %v156
    %v196 = vunpack.c.l.b16 %v157
    %v197 = vunpack.c.l.b16 %v158
    %v198 = vunpack.c.l.b16 %v159
    %v199 = vunpack.c.l.b16 %v160
    %v200 = vunpack.c.l.b16 %v161
    %v201 = vunpack.c.l.b16 %v162
    %v202 = vunpack.c.l.b16 %v163
    %v203 = vunpack.c.l.b16 %v164
    %v204 = vunpack.c.l.b16 %v165
    %v205 = vunpack.c.l.b16 %v166
    %v206 = vpack.c.b16 %v191, %v190
    %v207 = vpack.c.b16 %v193, %v192
    %v208 = vpack.c.b16 %v195, %v194
    %v209 = vpack.c.b16 %v197, %v196
    %v210 = vpack.c.b16 %v199, %v198
    %v211 = vpack.c.b16 %v201, %v200
    %v212 = vpack.c.b16 %v203, %v202
    %v213 = vpack.c.b16 %v205, %v204
    %222 = vmatprep.subr.bf16.mxu0 0
    %223 = vmatpush1.bf16.msra.mxu0 %v206
    %224 = vmatprep.subr.bf16.mxu0 0
    %225 = vmatpush1.bf16.msra.mxu0 %v207
    %226 = vmatprep.subr.bf16.mxu0 0
    %227 = vmatpush1.bf16.msra.mxu0 %v208
    %228 = vmatprep.subr.bf16.mxu0 0
    %229 = vmatpush1.bf16.msra.mxu0 %v209
    %230 = vmatprep.subr.bf16.mxu0 0
    %231 = vmatpush1.bf16.msra.mxu0 %v210
    %232 = vmatprep.subr.bf16.mxu0 0
    %233 = vmatpush1.bf16.msra.mxu0 %v211
    %234 = vmatprep.subr.bf16.mxu0 0
    %235 = vmatpush1.bf16.msra.mxu0 %v212
    %236 = vmatprep.subr.bf16.mxu0 0
    %237 = vmatpush1.bf16.msra.mxu0 %v213
    %238 = vmatprep.subr.bf16.mxu0 0
    %239 = vmatpush1.bf16.msra.mxu0 0
    %240 = vmatprep.subr.bf16.mxu0 0
    %241 = vmatpush1.bf16.msra.mxu0 0
    %242 = vmatprep.subr.bf16.mxu0 0
    %243 = vmatpush1.bf16.msra.mxu0 0
    %244 = vmatprep.subr.bf16.mxu0 0
    %245 = vmatpush1.bf16.msra.mxu0 0
    %246 = vmatprep.subr.bf16.mxu0 0
    %247 = vmatpush1.bf16.msra.mxu0 0
    %248 = vmatprep.subr.bf16.mxu0 0
    %249 = vmatpush1.bf16.msra.mxu0 0
    %250 = vmatprep.subr.bf16.mxu0 0
    %251 = vmatpush1.bf16.msra.mxu0 0
    %252 = vmatprep.subr.bf16.mxu0 0
    %253 = vmatpush1.bf16.msra.mxu0 0
    %254 = vmatprep.mubr.bf16.mxu0 0
    %255 = vmatmul.mubr.bf16.gmra.mrb[0].mxu0 %v150
    %v256 = vpop.f32.mrb[0].mxu0
    %v257 = vadd.f32 %v172, %v256
    %v258 = vpop.f32.mrb[0].mxu0
    %v259 = vpop.f32.mrb[0].mxu0
    %v260 = vpop.f32.mrb[0].mxu0
    %261 = vdwg.mxu0
    %v262 = vmax.f32 %v257, 0.0
    %v263 = vpack.c.bf16 %v262, %v262
    %s264 = scalar_lea.vmem [#allocation7], 64
    %v265 = vld [vmem:[%s264] sm:$0xf]
    %v266 = vld [vmem:[%s264 + $0x4] sm:$0xf]
    %v267 = vld [vmem:[%s264 + $0x8] sm:$0xf]
    %v268 = vld [vmem:[%s264 + $0xc] sm:$0xf]
    %v269 = vld [vmem:[%s264 + $0x10] sm:$0xf]
    %v270 = vld [vmem:[%s264 + $0x14] sm:$0xf]
    %v271 = vld [vmem:[%s264 + $0x18] sm:$0xf]
    %v272 = vld [vmem:[%s264 + $0x1c] sm:$0xf]
    %v273 = vld [vmem:[%s264 + $0x20] sm:$0xf]
    %v274 = vld [vmem:[%s264 + $0x24] sm:$0xf]
    %v275 = vld [vmem:[%s264 + $0x28] sm:$0xf]
    %v276 = vld [vmem:[%s264 + $0x2c] sm:$0xf]
    %v277 = vld [vmem:[%s264 + $0x30] sm:$0xf]
    %v278 = vld [vmem:[%s264 + $0x34] sm:$0xf]
    %v279 = vld [vmem:[%s264 + $0x38] sm:$0xf]
    %v280 = vld [vmem:[%s264 + $0x3c] sm:$0xf]
    %s281 = scalar_lea.vmem %s4, 1
    %v282 = vld [vmem:[%s281] sm:$0x1]
    %v284 = vlaneseq
    %v285 = vshrl.u32 %v284, 7
    %v286 = vsub.s32 0, %v285
    %v287 = vrot.slane %v282, %v286
    %v305 = vunpack.c.l.b16 %v265
    %v306 = vunpack.c.l.b16 %v266
    %v307 = vunpack.c.l.b16 %v267
    %v308 = vunpack.c.l.b16 %v268
    %v309 = vunpack.c.l.b16 %v269
    %v310 = vunpack.c.l.b16 %v270
    %v311 = vunpack.c.l.b16 %v271
    %v312 = vunpack.c.l.b16 %v272
    %v313 = vunpack.c.l.b16 %v273
    %v314 = vunpack.c.l.b16 %v274
    %v315 = vunpack.c.l.b16 %v275
    %v316 = vunpack.c.l.b16 %v276
    %v317 = vunpack.c.l.b16 %v277
    %v318 = vunpack.c.l.b16 %v278
    %v319 = vunpack.c.l.b16 %v279
    %v320 = vunpack.c.l.b16 %v280
    %v321 = vpack.c.b16 %v306, %v305
    %v322 = vpack.c.b16 %v308, %v307
    %v323 = vpack.c.b16 %v310, %v309
    %v324 = vpack.c.b16 %v312, %v311
    %v325 = vpack.c.b16 %v314, %v313
    %v326 = vpack.c.b16 %v316, %v315
    %v327 = vpack.c.b16 %v318, %v317
    %v328 = vpack.c.b16 %v320, %v319
    %337 = vmatprep.subr.bf16.mxu0 0
    %338 = vmatpush1.bf16.msra.mxu0 %v321
    %339 = vmatprep.subr.bf16.mxu0 0
    %340 = vmatpush1.bf16.msra.mxu0 %v322
    %341 = vmatprep.subr.bf16.mxu0 0
    %342 = vmatpush1.bf16.msra.mxu0 %v323
    %343 = vmatprep.subr.bf16.mxu0 0
    %344 = vmatpush1.bf16.msra.mxu0 %v324
    %345 = vmatprep.subr.bf16.mxu0 0
    %346 = vmatpush1.bf16.msra.mxu0 %v325
    %347 = vmatprep.subr.bf16.mxu0 0
    %348 = vmatpush1.bf16.msra.mxu0 %v326
    %349 = vmatprep.subr.bf16.mxu0 0
    %350 = vmatpush1.bf16.msra.mxu0 %v327
    %351 = vmatprep.subr.bf16.mxu0 0
    %352 = vmatpush1.bf16.msra.mxu0 %v328
    %353 = vmatprep.subr.bf16.mxu0 0
    %354 = vmatpush1.bf16.msra.mxu0 0
    %355 = vmatprep.subr.bf16.mxu0 0
    %356 = vmatpush1.bf16.msra.mxu0 0
    %357 = vmatprep.subr.bf16.mxu0 0
    %358 = vmatpush1.bf16.msra.mxu0 0
    %359 = vmatprep.subr.bf16.mxu0 0
    %360 = vmatpush1.bf16.msra.mxu0 0
    %361 = vmatprep.subr.bf16.mxu0 0
    %362 = vmatpush1.bf16.msra.mxu0 0
    %363 = vmatprep.subr.bf16.mxu0 0
    %364 = vmatpush1.bf16.msra.mxu0 0
    %365 = vmatprep.subr.bf16.mxu0 0
    %366 = vmatpush1.bf16.msra.mxu0 0
    %367 = vmatprep.subr.bf16.mxu0 0
    %368 = vmatpush1.bf16.msra.mxu0 0
    %369 = vmatprep.mubr.bf16.mxu0 0
    %370 = vmatmul.mubr.bf16.gmra.mrb[0].mxu0 %v263
    %v371 = vpop.f32.mrb[0].mxu0
    %v372 = vadd.f32 %v287, %v371
    %v373 = vpop.f32.mrb[0].mxu0
    %v374 = vpop.f32.mrb[0].mxu0
    %v375 = vpop.f32.mrb[0].mxu0
    %376 = vdwg.mxu0
    %v377 = vmax.f32 %v372, 0.0
    %v378 = vpack.c.bf16 %v377, %v377
    %v379 = vld [vmem:[#allocation8] sm:$0xf]
    %v380 = vld [vmem:[#allocation8 + $0x4] sm:$0xf]
    %v381 = vld [vmem:[#allocation8 + $0x8] sm:$0xf]
    %v382 = vld [vmem:[#allocation8 + $0xc] sm:$0xf]
    %v383 = vld [vmem:[#allocation8 + $0x10] sm:$0xf]
    %v384 = vld [vmem:[#allocation8 + $0x14] sm:$0xf]
    %v385 = vld [vmem:[#allocation8 + $0x18] sm:$0xf]
    %v386 = vld [vmem:[#allocation8 + $0x1c] sm:$0xf]
    %v387 = vld [vmem:[#allocation8 + $0x20] sm:$0xf]
    %v388 = vld [vmem:[#allocation8 + $0x24] sm:$0xf]
    %v389 = vld [vmem:[#allocation8 + $0x28] sm:$0xf]
    %v390 = vld [vmem:[#allocation8 + $0x2c] sm:$0xf]
    %v391 = vld [vmem:[#allocation8 + $0x30] sm:$0xf]
    %v392 = vld [vmem:[#allocation8 + $0x34] sm:$0xf]
    %v393 = vld [vmem:[#allocation8 + $0x38] sm:$0xf]
    %v394 = vld [vmem:[#allocation8 + $0x3c] sm:$0xf]
    %v395 = vld [vmem:[%s6] sm:$0x1]
    %v397 = vlaneseq
    %v398 = vshrl.u32 %v397, 7
    %v399 = vsub.s32 0, %v398
    %v400 = vrot.slane %v395, %v399
    %v418 = vunpack.c.l.b16 %v379
    %v419 = vunpack.c.l.b16 %v380
    %v420 = vunpack.c.l.b16 %v381
    %v421 = vunpack.c.l.b16 %v382
    %v422 = vunpack.c.l.b16 %v383
    %v423 = vunpack.c.l.b16 %v384
    %v424 = vunpack.c.l.b16 %v385
    %v425 = vunpack.c.l.b16 %v386
    %v426 = vunpack.c.l.b16 %v387
    %v427 = vunpack.c.l.b16 %v388
    %v428 = vunpack.c.l.b16 %v389
    %v429 = vunpack.c.l.b16 %v390
    %v430 = vunpack.c.l.b16 %v391
    %v431 = vunpack.c.l.b16 %v392
    %v432 = vunpack.c.l.b16 %v393
    %v433 = vunpack.c.l.b16 %v394
    %v434 = vpack.c.b16 %v419, %v418
    %v435 = vpack.c.b16 %v421, %v420
    %v436 = vpack.c.b16 %v423, %v422
    %v437 = vpack.c.b16 %v425, %v424
    %v438 = vpack.c.b16 %v427, %v426
    %v439 = vpack.c.b16 %v429, %v428
    %v440 = vpack.c.b16 %v431, %v430
    %v441 = vpack.c.b16 %v433, %v432
    %450 = vmatprep.subr.bf16.mxu0 0
    %451 = vmatpush1.bf16.msra.mxu0 %v434
    %452 = vmatprep.subr.bf16.mxu0 0
    %453 = vmatpush1.bf16.msra.mxu0 %v435
    %454 = vmatprep.subr.bf16.mxu0 0
    %455 = vmatpush1.bf16.msra.mxu0 %v436
    %456 = vmatprep.subr.bf16.mxu0 0
    %457 = vmatpush1.bf16.msra.mxu0 %v437
    %458 = vmatprep.subr.bf16.mxu0 0
    %459 = vmatpush1.bf16.msra.mxu0 %v438
    %460 = vmatprep.subr.bf16.mxu0 0
    %461 = vmatpush1.bf16.msra.mxu0 %v439
    %462 = vmatprep.subr.bf16.mxu0 0
    %463 = vmatpush1.bf16.msra.mxu0 %v440
    %464 = vmatprep.subr.bf16.mxu0 0
    %465 = vmatpush1.bf16.msra.mxu0 %v441
    %466 = vmatprep.subr.bf16.mxu0 0
    %467 = vmatpush1.bf16.msra.mxu0 0
    %468 = vmatprep.subr.bf16.mxu0 0
    %469 = vmatpush1.bf16.msra.mxu0 0
    %470 = vmatprep.subr.bf16.mxu0 0
    %471 = vmatpush1.bf16.msra.mxu0 0
    %472 = vmatprep.subr.bf16.mxu0 0
    %473 = vmatpush1.bf16.msra.mxu0 0
    %474 = vmatprep.subr.bf16.mxu0 0
    %475 = vmatpush1.bf16.msra.mxu0 0
    %476 = vmatprep.subr.bf16.mxu0 0
    %477 = vmatpush1.bf16.msra.mxu0 0
    %478 = vmatprep.subr.bf16.mxu0 0
    %479 = vmatpush1.bf16.msra.mxu0 0
    %480 = vmatprep.subr.bf16.mxu0 0
    %481 = vmatpush1.bf16.msra.mxu0 0
    %482 = vmatprep.mubr.bf16.mxu0 0
    %483 = vmatmul.mubr.bf16.gmra.mrb[0].mxu0 %v378
    %v484 = vpop.f32.mrb[0].mxu0
    %v485 = vadd.f32 %v400, %v484
    %v486 = vpop.f32.mrb[0].mxu0
    %v487 = vpop.f32.mrb[0].mxu0
    %v488 = vpop.f32.mrb[0].mxu0
    %489 = vdwg.mxu0
    %v490 = vtanh.pop %v485
    %491 = vst [vmem:[#allocation10] sm:$0xff] %v490
    // Predicated region
    $region46: #{tpu_custom_call.1} parent=1 // pred_check
      _
    $region47: #{tpu_custom_call.1} parent=1 // pred_check_branch
      %493 = sbr.rel (0) target = $region49
    $region48: #{tpu_custom_call.1} parent=1 // pred_region
      %s495 = ssub.s32 128, 128
      %496 = vsyncadd [#allocation4], %s495
      %s498 = sshll.u32 [#allocation10], 4
      %s499 = int_to_ptr.vmem [resolvable:$true] %s498
      %501 = dma.vmem_to_hbm [thread:$0]  %s499, 128, %s7, [#allocation4]
    $region49: #{tpu_custom_call.1} parent=1 // pred_fallthru
      _
    // Predicated region
    $region50: #{tpu_custom_call.1} parent=1 // pred_check
      _
    $region51: #{tpu_custom_call.1} parent=1 // pred_check_branch
      %503 = sbr.rel (0) target = $region53
    $region52: #{tpu_custom_call.1} parent=1 // pred_region
      %504 = dma.done [#allocation4], 128
    $region53: #{tpu_custom_call.1} parent=1 // pred_fallthru
      _
    %505 = vsyncpa [#allocation3], 1
    %506 = vsyncpa [#allocation6], 1
    %507 = vsyncpa [#allocation9], 1
    %508 = vsyncpa [#allocation4], 1

</llo_original>
